<compile_context>
chip_gen: v6e
topology: v6e:2x2x1
jax: 0.10.0
libtpu: 0.0.40
codegen_flags: <defaults>
</compile_context>

<pallas_src>
import numpy as np
import jax
import jax.numpy as jnp
from jax import lax
from jax.experimental import pallas as pl
from jax.experimental.pallas import tpu as pltpu

TOPK = 5
OUT_W = 128          # lane-dense output width (wrapper slices the real columns)
PAD_IDX = -1.0


def _round_up(x, m):
    return ((x + m - 1) // m) * m


def _cdiv(a, b):
    return -(-a // b)


# ----------------------------------------------------------------------------
# Kernel 1: softmax + top-5 (EvalB.generate_results hot path)
#   block: (ROW_BLK, V_pad) rows of flattened (B*E, V) logits
#   outputs: top-5 softmax probs + verb ids, packed in lanes [0:5) of a
#            (ROW_BLK, 128) tile -> one unmasked lane-dense store per output.
# ----------------------------------------------------------------------------
def _verb_topk_kernel(logits_ref, vals_ref, idx_ref):
    x = logits_ref[...].astype(jnp.float32)              # (Rb, Vp)
    m = jnp.max(x, axis=-1, keepdims=True)
    e = jnp.exp(x - m)                                    # pads (-inf) -> 0, never win
    s = jnp.sum(e, axis=-1, keepdims=True)
    inv_s = pl.reciprocal(s, approx=False)                # EUP slot; exact for 1e-5 tol

    v_pad = x.shape[-1]
    lane = lax.broadcasted_iota(jnp.int32, x.shape, 1)             # (Rb, Vp)
    out_lane = lax.broadcasted_iota(jnp.int32, (x.shape[0], OUT_W), 1)

    vals = jnp.zeros((x.shape[0], OUT_W), jnp.float32)
    idxs = jnp.zeros((x.shape[0], OUT_W), jnp.int32)

    work = e                                              # e >= 0 so -1.0 knockout safe
    for k in range(TOPK):                                 # static 5-way unroll
        mx = jnp.max(work, axis=-1, keepdims=True)        # (Rb, 1)
        cand = jnp.where(work >= mx, lane, v_pad)
        sel = jnp.min(cand, axis=-1, keepdims=True)       # lowest tied index (== top_k)
        vals = jnp.where(out_lane == k, mx * inv_s, vals)
        idxs = jnp.where(out_lane == k, sel, idxs)
        work = jnp.where(lane == sel, -1.0, work)         # knock out the winner

    vals_ref[...] = vals                                  # single lane-dense store
    idx_ref[...] = idxs                                   # single lane-dense store


def verb_softmax_topk(logits, row_block=8):
    """logits: (B, E, V) -> (top5_probs (B,E,5) f32, top5_ids (B,E,5) i32)."""
    B, E, V = logits.shape
    rows = B * E
    # >=2 grid steps so both v7x TensorCores get work; raise row_block for big batches.
    n_blk = max(2, _cdiv(rows, row_block))
    rows_p = n_blk * row_block
    v_p = _round_up(V, 128)

    x = logits.reshape(rows, V).astype(jnp.float32)
    # single pad: extra rows -> 0.0 (harmless, dropped), extra lanes -> -inf (never win)
    x = jnp.pad(x, ((0, rows_p - rows), (0, v_p - V)),
                constant_values=((0.0, 0.0), (0.0, float("-inf"))))

    vals, idxs = pl.pallas_call(
        _verb_topk_kernel,
        out_shape=(jax.ShapeDtypeStruct((rows_p, OUT_W), jnp.float32),
                   jax.ShapeDtypeStruct((rows_p, OUT_W), jnp.int32)),
        grid=(rows_p // row_block,),
        in_specs=[pl.BlockSpec((row_block, v_p), lambda i: (i, 0))],
        out_specs=(pl.BlockSpec((row_block, OUT_W), lambda i: (i, 0)),
                   pl.BlockSpec((row_block, OUT_W), lambda i: (i, 0))),
        compiler_params=pltpu.CompilerParams(dimension_semantics=("parallel",)),
    )(x)

    top_vals = vals[:rows, :TOPK].reshape(B, E, TOPK)
    top_idx = idxs[:rows, :TOPK].reshape(B, E, TOPK)
    return top_vals, top_idx


# ----------------------------------------------------------------------------
# Kernel 2: grounding IoU statistics (grounding_metric hot path)
#   layout: roles on lanes (R padded to 128), batch on sublanes (8-row blocks),
#   coordinates split into planes, GT frames stacked on a leading F axis.
#   out lane 0 = mean IoU over valid roles, lane 1 = frac > 0.3, lane 2 = frac > 0.5
# ----------------------------------------------------------------------------
def _iou_kernel(pred_xy_ref, pred_frame_ref, role_mask_ref,
                gt_xy_ref, gt_frame_ref, gt_mask_ref, out_ref):
    px1 = pred_xy_ref[0]                                  # (Bb, Rp)
    py1 = pred_xy_ref[1]
    px2 = pred_xy_ref[2]
    py2 = pred_xy_ref[3]
    gx1 = gt_xy_ref[0]                                    # (F, Bb, Rp)
    gy1 = gt_xy_ref[1]
    gx2 = gt_xy_ref[2]
    gy2 = gt_xy_ref[3]

    x_left = jnp.maximum(px1[None], gx1)
    y_top = jnp.maximum(py1[None], gy1)
    x_right = jnp.minimum(px2[None], gx2)
    y_bottom = jnp.minimum(py2[None], gy2)
    iw = x_right - x_left
    ih = y_bottom - y_top
    inter = jnp.where(jnp.logical_and(iw > 0, ih > 0), iw * ih, 0.0)
    area_p = (px2 - px1) * (py2 - py1)                    # (Bb, Rp)
    area_g = (gx2 - gx1) * (gy2 - gy1)                    # (F, Bb, Rp)
    union = area_p[None] + area_g - inter
    safe_union = jnp.where(union > 0, union, 1.0)         # guard degenerate boxes
    iou = jnp.where(union > 0,
                    inter * pl.reciprocal(safe_union, approx=False), 0.0)

    gt_frames = gt_frame_ref[...]                         # (F, Bb, Rp)
    gt_mask = gt_mask_ref[...]                            # (F, Bb, Rp)
    pred_frame = pred_frame_ref[...]                      # (Bb, Rp)
    match = jnp.logical_and(gt_mask > 0, gt_frames == pred_frame[None])
    iou = jnp.where(match, iou, 0.0)
    iou_role = jnp.max(iou, axis=0)                       # max over GT frames (VPU)

    has_frame = jnp.max(jnp.where(gt_frames != PAD_IDX, 1.0, 0.0), axis=0)
    role_valid = role_mask_ref[...] * has_frame           # (Bb, Rp)

    denom = jnp.maximum(jnp.sum(role_valid, axis=-1, keepdims=True), 1e-6)
    inv_d = pl.reciprocal(denom, approx=False)            # (Bb, 1)
    raw = jnp.sum(iou_role * role_valid, axis=-1, keepdims=True) * inv_d
    f30 = jnp.sum(jnp.where(iou_role > 0.3, 1.0, 0.0) * role_valid,
                  axis=-1, keepdims=True) * inv_d
    f50 = jnp.sum(jnp.where(iou_role > 0.5, 1.0, 0.0) * role_valid,
                  axis=-1, keepdims=True) * inv_d

    out_lane = lax.broadcasted_iota(jnp.int32, (iou_role.shape[0], OUT_W), 1)
    out = jnp.where(out_lane == 0, raw, 0.0)
    out = jnp.where(out_lane == 1, f30, out)
    out = jnp.where(out_lane == 2, f50, out)
    out_ref[...] = out                                    # single lane-dense store


def grounding_iou_stats(pred_box, pred_frame, role_mask, gt_box, gt_frame, gt_mask):
    """pred_box (B,R,4), pred_frame (B,R), role_mask (B,R),
       gt_box (B,R,F,4), gt_frame (B,R,F), gt_mask (B,R,F) -> (B, 3) stats."""
    B, R, F, _ = gt_box.shape
    b_blk = 8
    n_blk = max(2, _cdiv(B, b_blk))        # >=2 parallel steps (v7x has 2 TCs)
    b_p = n_blk * b_blk
    r_p = _round_up(R, 128)
    f32 = jnp.float32

    def pad_br(a, fill):
        return jnp.pad(a.astype(f32), ((0, b_p - B), (0, r_p - R)),
                       constant_values=fill)

    def pad_fbr(a, fill):
        return jnp.pad(a.astype(f32), ((0, 0), (0, b_p - B), (0, r_p - R)),
                       constant_values=fill)

    pred_xy = jnp.pad(jnp.transpose(pred_box.astype(f32), (2, 0, 1)),
                      ((0, 0), (0, b_p - B), (0, r_p - R)))            # (4, Bp, Rp)
    gt_xy = jnp.pad(jnp.transpose(gt_box.astype(f32), (3, 2, 0, 1)),
                    ((0, 0), (0, 0), (0, b_p - B), (0, r_p - R)))      # (4, F, Bp, Rp)
    gt_f = pad_fbr(jnp.transpose(gt_frame, (2, 0, 1)), PAD_IDX)        # (F, Bp, Rp)
    gt_m = pad_fbr(jnp.transpose(gt_mask, (2, 0, 1)), 0.0)             # (F, Bp, Rp)
    p_f = pad_br(pred_frame, -2.0)                                     # (Bp, Rp) never matches
    r_m = pad_br(role_mask, 0.0)                                       # (Bp, Rp)

    out = pl.pallas_call(
        _iou_kernel,
        out_shape=jax.ShapeDtypeStruct((b_p, OUT_W), jnp.float32),
        grid=(b_p // b_blk,),
        in_specs=[
            pl.BlockSpec((4, b_blk, r_p), lambda b: (0, b, 0)),
            pl.BlockSpec((b_blk, r_p), lambda b: (b, 0)),
            pl.BlockSpec((b_blk, r_p), lambda b: (b, 0)),
            pl.BlockSpec((4, F, b_blk, r_p), lambda b: (0, 0, b, 0)),
            pl.BlockSpec((F, b_blk, r_p), lambda b: (0, b, 0)),
            pl.BlockSpec((F, b_blk, r_p), lambda b: (0, b, 0)),
        ],
        out_specs=pl.BlockSpec((b_blk, OUT_W), lambda b: (b, 0)),
        compiler_params=pltpu.CompilerParams(dimension_semantics=("parallel",)),
    )(pred_xy, p_f, r_m, gt_xy, gt_f, gt_m)
    return out[:B, :3]


# ----------------------------------------------------------------------------
# numpy reference for the IoU stats (mirrors grounding_metric semantics)
# ----------------------------------------------------------------------------
def _ref_iou_stats(pred_box, pred_frame, role_mask, gt_box, gt_frame, gt_mask):
    pred_box, pred_frame, role_mask, gt_box, gt_frame, gt_mask = (
        np.asarray(a, np.float64)
        for a in (pred_box, pred_frame, role_mask, gt_box, gt_frame, gt_mask))
    B, R, F, _ = gt_box.shape
    out = np.zeros((B, 3), np.float64)
    for b in range(B):
        ious = []
        for r in range(R):
            valid = role_mask[b, r] > 0 and np.any(gt_frame[b, r] != PAD_IDX)
            if not valid:
                continue
            best = 0.0
            for f in range(F):
                if gt_mask[b, r, f] > 0 and gt_frame[b, r, f] == pred_frame[b, r]:
                    bb1, bb2 = pred_box[b, r], gt_box[b, r, f]
                    xl, yt = max(bb1[0], bb2[0]), max(bb1[1], bb2[1])
                    xr, yb = min(bb1[2], bb2[2]), min(bb1[3], bb2[3])
                    if xr < xl or yb < yt:
                        iou = 0.0
                    else:
                        inter = (xr - xl) * (yb - yt)
                        a1 = (bb1[2] - bb1[0]) * (bb1[3] - bb1[1])
                        a2 = (bb2[2] - bb2[0]) * (bb2[3] - bb2[1])
                        iou = inter / (a1 + a2 - inter)
                    best = max(best, iou)
            ious.append(best)
        denom = max(len(ious), 1e-6)
        out[b, 0] = sum(ious) / denom
        out[b, 1] = sum(1.0 for i in ious if i > 0.3) / denom
        out[b, 2] = sum(1.0 for i in ious if i > 0.5) / denom
    return out


if __name__ == "__main__":
    # TODO(synk): dataloader loop, model.forward_gen, pickle/file dumps, GPT-2
    # decode, vocab lookups, cv2 drawing and distributed sync are host-side
    # control flow with no Pallas equivalent; only the tensor math is kerneled.
    key = jax.random.PRNGKey(0)
    B, E, V = 2, 5, 64        # batch, events per video, verb vocab size
    R, F = 10, 4              # flattened roles per video, GT frames per role

    k1, k2, k3 = jax.random.split(key, 3)

    # ---- verb logits (model.forward_gen -> verbs_5) ----
    logits = jax.random.normal(k1, (B, E, V), dtype=jnp.float32)
    top5_vals, top5_idx = verb_softmax_topk(logits)

    ref_probs = jax.nn.softmax(logits, axis=-1)
    ref_vals, ref_idx = jax.lax.top_k(ref_probs, TOPK)
    assert np.allclose(np.asarray(top5_vals), np.asarray(ref_vals), atol=1e-5)
    assert np.array_equal(np.asarray(top5_idx), np.asarray(ref_idx))

    # ---- grounding inputs (pred/GT boxes, frames, masks) ----
    kk = jax.random.split(k2, 4)
    p_xy = jax.random.uniform(kk[0], (B, R, 2), minval=0.0, maxval=50.0)
    p_wh = jax.random.uniform(kk[1], (B, R, 2), minval=5.0, maxval=50.0)
    pred_box = jnp.concatenate([p_xy, p_xy + p_wh], axis=-1)          # (B,R,4)

    g_xy = jax.random.uniform(kk[2], (B, R, F, 2), minval=0.0, maxval=50.0)
    g_wh = jax.random.uniform(kk[3], (B, R, F, 2), minval=5.0, maxval=50.0)
    gt_box = jnp.concatenate([g_xy, g_xy + g_wh], axis=-1)            # (B,R,F,4)

    gt_frame = jax.random.randint(k3, (B, R, F), 0, 8).astype(jnp.float32)
    gt_frame = gt_frame.at[:, :, F - 1].set(PAD_IDX)                  # pad last slot
    gt_mask = (gt_frame != PAD_IDX).astype(jnp.float32)

    pred_frame = gt_frame[:, :, 0]                                    # (B,R) matches
    role_mask = jnp.ones((B, R), jnp.float32).at[:, R - 2:].set(0.0)

    stats = grounding_iou_stats(pred_box, pred_frame, role_mask,
                                gt_box, gt_frame, gt_mask)            # (B,3)

    ref_stats = _ref_iou_stats(pred_box, pred_frame, role_mask,
                               gt_box, gt_frame, gt_mask)
    assert np.allclose(np.asarray(stats), ref_stats, rtol=1e-3, atol=1e-3)

    jax.block_until_ready((top5_vals, top5_idx, stats))
    print("KERNEL_OK")
</pallas_src>

<mosaic_0001>
module attributes {stable_mosaic.version = 11 : i64} {
  func.func @_verb_topk_kernel(%arg0: i32, %arg1: memref<8x128xf32, #tpu.memory_space<vmem>>, %arg2: memref<8x128xf32, #tpu.memory_space<vmem>>, %arg3: memref<8x128xi32, #tpu.memory_space<vmem>>) attributes {dimension_semantics = [#tpu.dimension_semantics<parallel>], iteration_bounds = array<i64: 2>, scalar_prefetch = 0 : i64, scratch_operands = 0 : i64, tpu.core_type = #tpu.core_type<tc>, window_params = [{transform_indices = @transform_0, window_bounds = array<i64: 8, 128>}, {transform_indices = @transform_1, window_bounds = array<i64: 8, 128>}, {transform_indices = @transform_2, window_bounds = array<i64: 8, 128>}]} {
    %c0 = arith.constant 0 : index
    %c0_0 = arith.constant 0 : index
    %0 = vector.load %arg1[%c0, %c0_0] : memref<8x128xf32, #tpu.memory_space<vmem>>, vector<8x128xf32>
    %cst = arith.constant dense<0xFF800000> : vector<8xf32>
    %1 = vector.multi_reduction <maximumf>, %0, %cst [1] : vector<8x128xf32> to vector<8xf32>
    %2 = vector.shape_cast %1 : vector<8xf32> to vector<8x1xf32>
    %3 = vector.broadcast %2 : vector<8x1xf32> to vector<8x128xf32>
    %4 = arith.subf %0, %3 : vector<8x128xf32>
    %5 = math.exp %4 : vector<8x128xf32>
    %cst_1 = arith.constant dense<0.000000e+00> : vector<8xf32>
    %6 = vector.multi_reduction <add>, %5, %cst_1 [1] : vector<8x128xf32> to vector<8xf32>
    %7 = vector.shape_cast %6 : vector<8xf32> to vector<8x1xf32>
    %8 = tpu.reciprocal %7 : vector<8x1xf32> -> vector<8x1xf32>
    %9 = tpu.iota {dimensions = array<i32: 1>} : vector<8x128xi32>
    %10 = tpu.iota {dimensions = array<i32: 1>} : vector<8x128xi32>
    %cst_2 = arith.constant 0.000000e+00 : f32
    %11 = vector.broadcast %cst_2 : f32 to vector<8x128xf32>
    %c0_i32 = arith.constant 0 : i32
    %12 = vector.broadcast %c0_i32 : i32 to vector<8x128xi32>
    %cst_3 = arith.constant dense<0xFF800000> : vector<8xf32>
    %13 = vector.multi_reduction <maximumf>, %5, %cst_3 [1] : vector<8x128xf32> to vector<8xf32>
    %14 = vector.shape_cast %13 : vector<8xf32> to vector<8x1xf32>
    %15 = vector.broadcast %14 : vector<8x1xf32> to vector<8x128xf32>
    %16 = arith.cmpf oge, %5, %15 : vector<8x128xf32>
    %c128_i32 = arith.constant 128 : i32
    %17 = vector.broadcast %c128_i32 : i32 to vector<8x128xi32>
    %18 = arith.select %16, %9, %17 : vector<8x128xi1>, vector<8x128xi32>
    %cst_4 = arith.constant dense<2147483647> : vector<8xi32>
    %19 = vector.multi_reduction <minsi>, %18, %cst_4 [1] : vector<8x128xi32> to vector<8xi32>
    %20 = vector.shape_cast %19 : vector<8xi32> to vector<8x1xi32>
    %c0_i32_5 = arith.constant 0 : i32
    %21 = vector.broadcast %c0_i32_5 : i32 to vector<8x128xi32>
    %22 = arith.cmpi eq, %10, %21 : vector<8x128xi32>
    %23 = arith.mulf %14, %8 : vector<8x1xf32>
    %24 = vector.shape_cast %23 : vector<8x1xf32> to vector<8x1xf32>
    %25 = vector.broadcast %24 : vector<8x1xf32> to vector<8x128xf32>
    %26 = arith.select %22, %25, %11 : vector<8x128xi1>, vector<8x128xf32>
    %c0_i32_6 = arith.constant 0 : i32
    %27 = vector.broadcast %c0_i32_6 : i32 to vector<8x128xi32>
    %28 = arith.cmpi eq, %10, %27 : vector<8x128xi32>
    %29 = vector.shape_cast %20 : vector<8x1xi32> to vector<8x1xi32>
    %30 = vector.broadcast %29 : vector<8x1xi32> to vector<8x128xi32>
    %31 = arith.select %28, %30, %12 : vector<8x128xi1>, vector<8x128xi32>
    %32 = vector.broadcast %20 : vector<8x1xi32> to vector<8x128xi32>
    %33 = arith.cmpi eq, %9, %32 : vector<8x128xi32>
    %cst_7 = arith.constant -1.000000e+00 : f32
    %34 = vector.broadcast %cst_7 : f32 to vector<8x128xf32>
    %35 = arith.select %33, %34, %5 : vector<8x128xi1>, vector<8x128xf32>
    %cst_8 = arith.constant dense<0xFF800000> : vector<8xf32>
    %36 = vector.multi_reduction <maximumf>, %35, %cst_8 [1] : vector<8x128xf32> to vector<8xf32>
    %37 = vector.shape_cast %36 : vector<8xf32> to vector<8x1xf32>
    %38 = vector.broadcast %37 : vector<8x1xf32> to vector<8x128xf32>
    %39 = arith.cmpf oge, %35, %38 : vector<8x128xf32>
    %c128_i32_9 = arith.constant 128 : i32
    %40 = vector.broadcast %c128_i32_9 : i32 to vector<8x128xi32>
    %41 = arith.select %39, %9, %40 : vector<8x128xi1>, vector<8x128xi32>
    %cst_10 = arith.constant dense<2147483647> : vector<8xi32>
    %42 = vector.multi_reduction <minsi>, %41, %cst_10 [1] : vector<8x128xi32> to vector<8xi32>
    %43 = vector.shape_cast %42 : vector<8xi32> to vector<8x1xi32>
    %c1_i32 = arith.constant 1 : i32
    %44 = vector.broadcast %c1_i32 : i32 to vector<8x128xi32>
    %45 = arith.cmpi eq, %10, %44 : vector<8x128xi32>
    %46 = arith.mulf %37, %8 : vector<8x1xf32>
    %47 = vector.shape_cast %46 : vector<8x1xf32> to vector<8x1xf32>
    %48 = vector.broadcast %47 : vector<8x1xf32> to vector<8x128xf32>
    %49 = arith.select %45, %48, %26 : vector<8x128xi1>, vector<8x128xf32>
    %c1_i32_11 = arith.constant 1 : i32
    %50 = vector.broadcast %c1_i32_11 : i32 to vector<8x128xi32>
    %51 = arith.cmpi eq, %10, %50 : vector<8x128xi32>
    %52 = vector.shape_cast %43 : vector<8x1xi32> to vector<8x1xi32>
    %53 = vector.broadcast %52 : vector<8x1xi32> to vector<8x128xi32>
    %54 = arith.select %51, %53, %31 : vector<8x128xi1>, vector<8x128xi32>
    %55 = vector.broadcast %43 : vector<8x1xi32> to vector<8x128xi32>
    %56 = arith.cmpi eq, %9, %55 : vector<8x128xi32>
    %cst_12 = arith.constant -1.000000e+00 : f32
    %57 = vector.broadcast %cst_12 : f32 to vector<8x128xf32>
    %58 = arith.select %56, %57, %35 : vector<8x128xi1>, vector<8x128xf32>
    %cst_13 = arith.constant dense<0xFF800000> : vector<8xf32>
    %59 = vector.multi_reduction <maximumf>, %58, %cst_13 [1] : vector<8x128xf32> to vector<8xf32>
    %60 = vector.shape_cast %59 : vector<8xf32> to vector<8x1xf32>
    %61 = vector.broadcast %60 : vector<8x1xf32> to vector<8x128xf32>
    %62 = arith.cmpf oge, %58, %61 : vector<8x128xf32>
    %c128_i32_14 = arith.constant 128 : i32
    %63 = vector.broadcast %c128_i32_14 : i32 to vector<8x128xi32>
    %64 = arith.select %62, %9, %63 : vector<8x128xi1>, vector<8x128xi32>
    %cst_15 = arith.constant dense<2147483647> : vector<8xi32>
    %65 = vector.multi_reduction <minsi>, %64, %cst_15 [1] : vector<8x128xi32> to vector<8xi32>
    %66 = vector.shape_cast %65 : vector<8xi32> to vector<8x1xi32>
    %c2_i32 = arith.constant 2 : i32
    %67 = vector.broadcast %c2_i32 : i32 to vector<8x128xi32>
    %68 = arith.cmpi eq, %10, %67 : vector<8x128xi32>
    %69 = arith.mulf %60, %8 : vector<8x1xf32>
    %70 = vector.shape_cast %69 : vector<8x1xf32> to vector<8x1xf32>
    %71 = vector.broadcast %70 : vector<8x1xf32> to vector<8x128xf32>
    %72 = arith.select %68, %71, %49 : vector<8x128xi1>, vector<8x128xf32>
    %c2_i32_16 = arith.constant 2 : i32
    %73 = vector.broadcast %c2_i32_16 : i32 to vector<8x128xi32>
    %74 = arith.cmpi eq, %10, %73 : vector<8x128xi32>
    %75 = vector.shape_cast %66 : vector<8x1xi32> to vector<8x1xi32>
    %76 = vector.broadcast %75 : vector<8x1xi32> to vector<8x128xi32>
    %77 = arith.select %74, %76, %54 : vector<8x128xi1>, vector<8x128xi32>
    %78 = vector.broadcast %66 : vector<8x1xi32> to vector<8x128xi32>
    %79 = arith.cmpi eq, %9, %78 : vector<8x128xi32>
    %cst_17 = arith.constant -1.000000e+00 : f32
    %80 = vector.broadcast %cst_17 : f32 to vector<8x128xf32>
    %81 = arith.select %79, %80, %58 : vector<8x128xi1>, vector<8x128xf32>
    %cst_18 = arith.constant dense<0xFF800000> : vector<8xf32>
    %82 = vector.multi_reduction <maximumf>, %81, %cst_18 [1] : vector<8x128xf32> to vector<8xf32>
    %83 = vector.shape_cast %82 : vector<8xf32> to vector<8x1xf32>
    %84 = vector.broadcast %83 : vector<8x1xf32> to vector<8x128xf32>
    %85 = arith.cmpf oge, %81, %84 : vector<8x128xf32>
    %c128_i32_19 = arith.constant 128 : i32
    %86 = vector.broadcast %c128_i32_19 : i32 to vector<8x128xi32>
    %87 = arith.select %85, %9, %86 : vector<8x128xi1>, vector<8x128xi32>
    %cst_20 = arith.constant dense<2147483647> : vector<8xi32>
    %88 = vector.multi_reduction <minsi>, %87, %cst_20 [1] : vector<8x128xi32> to vector<8xi32>
    %89 = vector.shape_cast %88 : vector<8xi32> to vector<8x1xi32>
    %c3_i32 = arith.constant 3 : i32
    %90 = vector.broadcast %c3_i32 : i32 to vector<8x128xi32>
    %91 = arith.cmpi eq, %10, %90 : vector<8x128xi32>
    %92 = arith.mulf %83, %8 : vector<8x1xf32>
    %93 = vector.shape_cast %92 : vector<8x1xf32> to vector<8x1xf32>
    %94 = vector.broadcast %93 : vector<8x1xf32> to vector<8x128xf32>
    %95 = arith.select %91, %94, %72 : vector<8x128xi1>, vector<8x128xf32>
    %c3_i32_21 = arith.constant 3 : i32
    %96 = vector.broadcast %c3_i32_21 : i32 to vector<8x128xi32>
    %97 = arith.cmpi eq, %10, %96 : vector<8x128xi32>
    %98 = vector.shape_cast %89 : vector<8x1xi32> to vector<8x1xi32>
    %99 = vector.broadcast %98 : vector<8x1xi32> to vector<8x128xi32>
    %100 = arith.select %97, %99, %77 : vector<8x128xi1>, vector<8x128xi32>
    %101 = vector.broadcast %89 : vector<8x1xi32> to vector<8x128xi32>
    %102 = arith.cmpi eq, %9, %101 : vector<8x128xi32>
    %cst_22 = arith.constant -1.000000e+00 : f32
    %103 = vector.broadcast %cst_22 : f32 to vector<8x128xf32>
    %104 = arith.select %102, %103, %81 : vector<8x128xi1>, vector<8x128xf32>
    %cst_23 = arith.constant dense<0xFF800000> : vector<8xf32>
    %105 = vector.multi_reduction <maximumf>, %104, %cst_23 [1] : vector<8x128xf32> to vector<8xf32>
    %106 = vector.shape_cast %105 : vector<8xf32> to vector<8x1xf32>
    %107 = vector.broadcast %106 : vector<8x1xf32> to vector<8x128xf32>
    %108 = arith.cmpf oge, %104, %107 : vector<8x128xf32>
    %c128_i32_24 = arith.constant 128 : i32
    %109 = vector.broadcast %c128_i32_24 : i32 to vector<8x128xi32>
    %110 = arith.select %108, %9, %109 : vector<8x128xi1>, vector<8x128xi32>
    %cst_25 = arith.constant dense<2147483647> : vector<8xi32>
    %111 = vector.multi_reduction <minsi>, %110, %cst_25 [1] : vector<8x128xi32> to vector<8xi32>
    %112 = vector.shape_cast %111 : vector<8xi32> to vector<8x1xi32>
    %c4_i32 = arith.constant 4 : i32
    %113 = vector.broadcast %c4_i32 : i32 to vector<8x128xi32>
    %114 = arith.cmpi eq, %10, %113 : vector<8x128xi32>
    %115 = arith.mulf %106, %8 : vector<8x1xf32>
    %116 = vector.shape_cast %115 : vector<8x1xf32> to vector<8x1xf32>
    %117 = vector.broadcast %116 : vector<8x1xf32> to vector<8x128xf32>
    %118 = arith.select %114, %117, %95 : vector<8x128xi1>, vector<8x128xf32>
    %c4_i32_26 = arith.constant 4 : i32
    %119 = vector.broadcast %c4_i32_26 : i32 to vector<8x128xi32>
    %120 = arith.cmpi eq, %10, %119 : vector<8x128xi32>
    %121 = vector.shape_cast %112 : vector<8x1xi32> to vector<8x1xi32>
    %122 = vector.broadcast %121 : vector<8x1xi32> to vector<8x128xi32>
    %123 = arith.select %120, %122, %100 : vector<8x128xi1>, vector<8x128xi32>
    %c0_27 = arith.constant 0 : index
    %c0_28 = arith.constant 0 : index
    %124 = vector.load %arg2[%c0_27, %c0_28] : memref<8x128xf32, #tpu.memory_space<vmem>>, vector<8x128xf32>
    tpu.vector_store %arg2[%c0_27, %c0_28], %118 {strides = array<i32>} : memref<8x128xf32, #tpu.memory_space<vmem>>, vector<8x128xf32>,
    %c0_29 = arith.constant 0 : index
    %c0_30 = arith.constant 0 : index
    %125 = vector.load %arg3[%c0_29, %c0_30] : memref<8x128xi32, #tpu.memory_space<vmem>>, vector<8x128xi32>
    tpu.vector_store %arg3[%c0_29, %c0_30], %123 {strides = array<i32>} : memref<8x128xi32, #tpu.memory_space<vmem>>, vector<8x128xi32>,
    return
  }
  func.func @transform_0(%arg0: i32) -> (i32, i32) {
    %c0_i32 = arith.constant 0 : i32
    %c0_i32_0 = arith.constant 0 : i32
    return %arg0, %c0_i32 : i32, i32
  }
  func.func @transform_1(%arg0: i32) -> (i32, i32) {
    %c0_i32 = arith.constant 0 : i32
    %c0_i32_0 = arith.constant 0 : i32
    return %arg0, %c0_i32 : i32, i32
  }
  func.func @transform_2(%arg0: i32) -> (i32, i32) {
    %c0_i32 = arith.constant 0 : i32
    %c0_i32_0 = arith.constant 0 : i32
    return %arg0, %c0_i32 : i32, i32
  }
}

</mosaic_0001>

<llo_original>
// kernel: tpu_custom_call.1
$region0: #{tpu_custom_call.1}
  #allocation0 [shape = 'u32[]', space=smem, size = 0x4, offset = 0x4, fixed_abs, tag = 'smem constant byte address 0x4 - core index']
  #allocation1 [shape = 'u32[144,128]{1,0:T(1,128)}', space=vmem, size = 0x12000, scoped, tag = 'internal scratch']
  %s0 = inlined_call_operand.hbm [shape: f32[16,128], index: 0, kind: input, shape index: {}]
  %s1 = inlined_call_operand.hbm [shape: f32[16,128], index: 1, kind: output, shape index: {0}]
  %s2 = inlined_call_operand.hbm [shape: s32[16,128], index: 2, kind: output, shape index: {1}]
  %3 = xla_tuple %s1, %s2
  %s4 = sld [smem:[#allocation0]]
  $region49: #{tpu_custom_call.1} parent=0
    _
  %s6 = ssub.s32 1, %s4
  %s7 = scalar_select 0, %s6, %s4
  $region1: #{tpu_custom_call.1} parent=0
    #allocation2 [shape = 'u8[8192]{0}', space=vmem, size = 0x2000, scoped, tag = 'input window, operand 0']
    #allocation3 [shape = 's32[2]{0}', space=sflag, size = 0x8, scoped, tag = 'scoped memory for tpu_custom_call.1']
    #allocation4 [shape = 's32[2]{0}', space=sflag, size = 0x8, scoped, tag = 'scoped memory for tpu_custom_call.1']
    #allocation5 [shape = 'u8[8192]{0}', space=vmem, size = 0x2000, scoped, tag = 'output window, operand 0']
    #allocation6 [shape = 'u8[8192]{0}', space=vmem, size = 0x2000, scoped, tag = 'output window, operand 1']
    #allocation7 [shape = 's32[2]{0}', space=sflag, size = 0x8, scoped, tag = 'scoped memory for tpu_custom_call.1']
    %8 = vsyncpa [#allocation3], 0
    %s9 = scalar_lea.sflag [#allocation3], 1
    %10 = vsyncpa %s9, 0
    %11 = vsyncpa [#allocation4], 0
    %s12 = scalar_lea.sflag [#allocation4], 1
    %13 = vsyncpa %s12, 0
    %14 = vsyncpa [#allocation7], 0
    %s15 = scalar_lea.sflag [#allocation7], 1
    %16 = vsyncpa %s15, 0
    loop: start=0, step=1, limit=4
    $region2: #{tpu_custom_call.1} parent=1 // loop_pre_header
      _
    $region3: #{tpu_custom_call.1} parent=1 // loop_header
      %s18 = sphi 0, %s22
      %p19 = scmp.ge.s32.totalorder %s18, 4
      %s28 = sphi 0, %s30
      %s31 = sphi 0, %s28
      %s32 = sphi 0, %s31
      %s48 = sphi 0, %s32
      %s54 = sphi 0, %s56
      %s57 = sphi 0, %s54
      %s58 = sphi 0, %s57
      %s74 = sphi 0, %s58
      %s80 = sphi 0, %s82
      %s83 = sphi 0, %s80
      %s84 = sphi 0, %s83
      %s100 = sphi 0, %s84
    $region4: #{tpu_custom_call.1} parent=1 // loop_header_branch
      %21 = sbr.rel (%p19) target = $region8
    $region5: #{tpu_custom_call.1} parent=1 // loop_body
      %s23 = ssub.s32 %s18, 1
      %s24 = ssub.s32 %s18, 2
      %s25 = sadd.s32 %s18, 1
      %s26 = ssub.s32 %s18, %s25
      %p27 = scmp.eq.s32.totalorder %s26, 0
      %s29 = sadd.s32 %s28, 1
      %s30 = scalar_select %p27, %s28, %s29
      %p33 = pneg %p27
      %p34 = scmp.eq.s32.totalorder %s18, 1
      %p35 = por %p33, %p34
      %p36 = scmp.ne.s32.totalorder %s28, %s31
      %p37 = scmp.eq.s32.totalorder %s18, 0
      %p38 = por %p36, %p37
      %p39 = scmp.ne.s32.totalorder %s28, %s31
      %p40 = scmp.eq.s32.totalorder %s23, 1
      %p41 = por %p39, %p40
      %p42 = scmp.ne.s32.totalorder %s31, %s32
      %p43 = scmp.eq.s32.totalorder %s23, 0
      %p44 = por %p42, %p43
      %p45 = scmp.ne.s32.totalorder %s31, %s32
      %p46 = scmp.eq.s32.totalorder %s24, 1
      %p47 = por %p45, %p46
      %p49 = scmp.ne.s32.totalorder %s32, %s48
      %p50 = scmp.eq.s32.totalorder %s24, 0
      %p51 = por %p49, %p50
      %s52 = ssub.s32 %s18, %s25
      %p53 = scmp.eq.s32.totalorder %s52, 0
      %s55 = sadd.s32 %s54, 1
      %s56 = scalar_select %p53, %s54, %s55
      %p59 = pneg %p53
      %p60 = scmp.eq.s32.totalorder %s18, 1
      %p61 = por %p59, %p60
      %p62 = scmp.ne.s32.totalorder %s54, %s57
      %p63 = scmp.eq.s32.totalorder %s18, 0
      %p64 = por %p62, %p63
      %p65 = scmp.ne.s32.totalorder %s54, %s57
      %p66 = scmp.eq.s32.totalorder %s23, 1
      %p67 = por %p65, %p66
      %p68 = scmp.ne.s32.totalorder %s57, %s58
      %p69 = scmp.eq.s32.totalorder %s23, 0
      %p70 = por %p68, %p69
      %p71 = scmp.ne.s32.totalorder %s57, %s58
      %p72 = scmp.eq.s32.totalorder %s24, 1
      %p73 = por %p71, %p72
      %p75 = scmp.ne.s32.totalorder %s58, %s74
      %p76 = scmp.eq.s32.totalorder %s24, 0
      %p77 = por %p75, %p76
      %s78 = ssub.s32 %s18, %s25
      %p79 = scmp.eq.s32.totalorder %s78, 0
      %s81 = sadd.s32 %s80, 1
      %s82 = scalar_select %p79, %s80, %s81
      %p85 = pneg %p79
      %p86 = scmp.eq.s32.totalorder %s18, 1
      %p87 = por %p85, %p86
      %p88 = scmp.ne.s32.totalorder %s80, %s83
      %p89 = scmp.eq.s32.totalorder %s18, 0
      %p90 = por %p88, %p89
      %p91 = scmp.ne.s32.totalorder %s80, %s83
      %p92 = scmp.eq.s32.totalorder %s23, 1
      %p93 = por %p91, %p92
      %p94 = scmp.ne.s32.totalorder %s83, %s84
      %p95 = scmp.eq.s32.totalorder %s23, 0
      %p96 = por %p94, %p95
      %p97 = scmp.ne.s32.totalorder %s83, %s84
      %p98 = scmp.eq.s32.totalorder %s24, 1
      %p99 = por %p97, %p98
      %p101 = scmp.ne.s32.totalorder %s84, %s100
      %p102 = scmp.eq.s32.totalorder %s24, 0
      %p103 = por %p101, %p102
      %p104 = scmp.le.s32.totalorder 1, %s18
      %p105 = scmp.lt.s32.totalorder %s18, 3
      %p106 = pnand %p104, %p105
      %p107 = pneg %p106
      // Predicated region
      $region9: #{tpu_custom_call.1} parent=5 // pred_check
        _
      $region10: #{tpu_custom_call.1} parent=5 // pred_check_branch
        %109 = sbr.rel (%p106) target = $region12
      $region11: #{tpu_custom_call.1} parent=5 // pred_region
        %s110 = ssub.s32 %s18, 1
      $region12: #{tpu_custom_call.1} parent=5 // pred_fallthru
        _
      %p111 = scmp.lt.s32.totalorder %s18, 2
      // Predicated region
      $region13: #{tpu_custom_call.1} parent=5 // pred_check
        %p112 = pneg %p111
      $region14: #{tpu_custom_call.1} parent=5 // pred_check_branch
        %114 = sbr.rel (%p112) target = $region16
      $region15: #{tpu_custom_call.1} parent=5 // pred_region
        // Predicated region
        $region17: #{tpu_custom_call.1} parent=15 // pred_check
          %p115 = pneg %p38
        $region18: #{tpu_custom_call.1} parent=15 // pred_check_branch
          %117 = sbr.rel (%p115) target = $region20
        $region19: #{tpu_custom_call.1} parent=15 // pred_region
          %s118 = sand.u32 %s28, 1
          %s119 = scalar_lea.sflag [#allocation3], %s118
          %s120 = sand.u32 %s28, 1
          %s121 = smul.addr %s120, 8
          %s122 = scalar_lea.vmem [#allocation2], %s121
          %s124 = ssub.s32 128, 128
          %125 = vsyncadd %s119, %s124
          %s126 = smul.addr %s18, 128
          %s127 = scalar_lea.hbm %s0, %s126
          %s129 = sshll.u32 %s122, 4
          %s130 = int_to_ptr.vmem [resolvable:$true] %s129
          %132 = dma.hbm_to_vmem [thread:$0]  %s127, 128, %s130, %s119
        $region20: #{tpu_custom_call.1} parent=15 // pred_fallthru
          _
      $region16: #{tpu_custom_call.1} parent=5 // pred_fallthru
        _
      %p133 = scmp.le.s32.totalorder 1, %s18
      %p134 = scmp.lt.s32.totalorder %s18, 3
      %p135 = pnand %p133, %p134
      %p136 = pneg %p135
      // Predicated region
      $region21: #{tpu_custom_call.1} parent=5 // pred_check
        _
      $region22: #{tpu_custom_call.1} parent=5 // pred_check_branch
        %138 = sbr.rel (%p135) target = $region24
      $region23: #{tpu_custom_call.1} parent=5 // pred_region
        %s139 = ssub.s32 %s18, 1
        %s140 = sand.u32 %s31, 1
        %s141 = scalar_lea.sflag [#allocation3], %s140
        %s142 = sand.u32 %s31, 1
        %s143 = smul.addr %s142, 8
        %s144 = scalar_lea.vmem [#allocation2], %s143
        // Predicated region
        $region25: #{tpu_custom_call.1} parent=23 // pred_check
          %p145 = pneg %p44
        $region26: #{tpu_custom_call.1} parent=23 // pred_check_branch
          %147 = sbr.rel (%p145) target = $region28
        $region27: #{tpu_custom_call.1} parent=23 // pred_region
          %148 = dma.done %s141, 128
        $region28: #{tpu_custom_call.1} parent=23 // pred_fallthru
          _
        %s149 = sand.u32 %s31, 1
        %s150 = scalar_lea.sflag [#allocation3], %s149
        %s151 = sand.u32 %s31, 1
        %s152 = smul.addr %s151, 8
        %s153 = scalar_lea.vmem [#allocation2], %s152
        %p154 = pneg %p44
        %p155 = pneg %p41
        %p156 = pneg %p70
        %p157 = pneg %p67
        %s158 = sand.u32 %s57, 1
        %s159 = scalar_lea.sflag [#allocation4], %s158
        %s160 = sand.u32 %s57, 1
        %s161 = smul.addr %s160, 8
        %s162 = scalar_lea.vmem [#allocation5], %s161
        %p163 = pneg %p96
        %p164 = pneg %p93
        %s165 = sand.u32 %s83, 1
        %s166 = scalar_lea.sflag [#allocation7], %s165
        %s167 = sand.u32 %s83, 1
        %s168 = smul.addr %s167, 8
        %s169 = scalar_lea.vmem [#allocation6], %s168
        %v170 = vld [vmem:[%s144] sm:$0xff]
        %171 = vmax.xlane.f32.xlu0 %v170
        %v172 = vpop.xlane.xlu0 %171
        %v173 = vsub.f32 %v170, %v172
        %v174 = vmul.f32 %v173, 1.442695
        %v175 = vpow.pop %v174
        %176 = vadd.xlane.f32.xlu0 %v175
        %v177 = vpop.xlane.xlu0 %176
        %v178 = vrcp.pop %v177
        %v179 = vlaneseq
        %v180 = vand.u32 %v179, 127
        %181 = vmax.xlane.f32.xlu0 %v175
        %v182 = vpop.xlane.xlu0 %181
        %vm183 = vcmp.ge.f32.partialorder %v175, %v182
        %v184 = vsel %vm183, %v180, 128
        %v185 = vand.u32 %v184, 65535
        %v186 = vshra.s32 %v184, 16
        %v187 = vcvt.s32.f32 %v185
        %v188 = vcvt.s32.f32 %v186
        %189 = vmin.xlane.f32.xlu0 %v188
        %v190 = vpop.xlane.xlu0 %189
        %vm191 = vcmp.eq.f32.partialorder %v188, %v190
        %v192 = vsel %vm191, %v187, inf
        %193 = vmin.xlane.f32.xlu0 %v192
        %v194 = vpop.xlane.xlu0 %193
        %v195 = vcvt.f32.s32 %v194
        %v196 = vcvt.f32.s32 %v190
        %v197 = vshll.u32 %v196, 16
        %v198 = vadd.s32 %v197, %v195
        %vm199 = vcmp.eq.s32.totalorder %v180, 0
        %v200 = vmul.f32 %v182, %v178
        %v201 = vsel %vm199, %v200, 0.0
        %v202 = vsel %vm199, %v198, 0
        %vm203 = vcmp.eq.s32.totalorder %v180, %v198
        %v204 = vsel %vm203, -1.0, %v175
        %205 = vmax.xlane.f32.xlu0 %v204
        %v206 = vpop.xlane.xlu0 %205
        %vm207 = vcmp.ge.f32.partialorder %v204, %v206
        %v208 = vsel %vm207, %v180, 128
        %v209 = vand.u32 %v208, 65535
        %v210 = vshra.s32 %v208, 16
        %v211 = vcvt.s32.f32 %v209
        %v212 = vcvt.s32.f32 %v210
        %213 = vmin.xlane.f32.xlu0 %v212
        %v214 = vpop.xlane.xlu0 %213
        %vm215 = vcmp.eq.f32.partialorder %v212, %v214
        %v216 = vsel %vm215, %v211, inf
        %217 = vmin.xlane.f32.xlu0 %v216
        %v218 = vpop.xlane.xlu0 %217
        %v219 = vcvt.f32.s32 %v218
        %v220 = vcvt.f32.s32 %v214
        %v221 = vshll.u32 %v220, 16
        %v222 = vadd.s32 %v221, %v219
        %vm223 = vcmp.eq.s32.totalorder %v180, 1
        %v224 = vmul.f32 %v206, %v178
        %v225 = vsel %vm223, %v224, %v201
        %v226 = vsel %vm223, %v222, %v202
        %vm227 = vcmp.eq.s32.totalorder %v180, %v222
        %v228 = vsel %vm227, -1.0, %v204
        %229 = vmax.xlane.f32.xlu0 %v228
        %v230 = vpop.xlane.xlu0 %229
        %vm231 = vcmp.ge.f32.partialorder %v228, %v230
        %v232 = vsel %vm231, %v180, 128
        %v233 = vand.u32 %v232, 65535
        %v234 = vshra.s32 %v232, 16
        %v235 = vcvt.s32.f32 %v233
        %v236 = vcvt.s32.f32 %v234
        %237 = vmin.xlane.f32.xlu0 %v236
        %v238 = vpop.xlane.xlu0 %237
        %vm239 = vcmp.eq.f32.partialorder %v236, %v238
        %v240 = vsel %vm239, %v235, inf
        %241 = vmin.xlane.f32.xlu0 %v240
        %v242 = vpop.xlane.xlu0 %241
        %v243 = vcvt.f32.s32 %v242
        %v244 = vcvt.f32.s32 %v238
        %v245 = vshll.u32 %v244, 16
        %v246 = vadd.s32 %v245, %v243
        %vm247 = vcmp.eq.s32.totalorder %v180, 2
        %v248 = vmul.f32 %v230, %v178
        %v249 = vsel %vm247, %v248, %v225
        %v250 = vsel %vm247, %v246, %v226
        %vm251 = vcmp.eq.s32.totalorder %v180, %v246
        %v252 = vsel %vm251, -1.0, %v228
        %253 = vmax.xlane.f32.xlu0 %v252
        %v254 = vpop.xlane.xlu0 %253
        %vm255 = vcmp.ge.f32.partialorder %v252, %v254
        %v256 = vsel %vm255, %v180, 128
        %v257 = vand.u32 %v256, 65535
        %v258 = vshra.s32 %v256, 16
        %v259 = vcvt.s32.f32 %v257
        %v260 = vcvt.s32.f32 %v258
        %261 = vmin.xlane.f32.xlu0 %v260
        %v262 = vpop.xlane.xlu0 %261
        %vm263 = vcmp.eq.f32.partialorder %v260, %v262
        %v264 = vsel %vm263, %v259, inf
        %265 = vmin.xlane.f32.xlu0 %v264
        %v266 = vpop.xlane.xlu0 %265
        %v267 = vcvt.f32.s32 %v266
        %v268 = vcvt.f32.s32 %v262
        %v269 = vshll.u32 %v268, 16
        %v270 = vadd.s32 %v269, %v267
        %vm271 = vcmp.eq.s32.totalorder %v180, 3
        %v272 = vmul.f32 %v254, %v178
        %v273 = vsel %vm271, %v272, %v249
        %v274 = vsel %vm271, %v270, %v250
        %vm275 = vcmp.eq.s32.totalorder %v180, %v270
        %v276 = vsel %vm275, -1.0, %v252
        %277 = vmax.xlane.f32.xlu0 %v276
        %v278 = vpop.xlane.xlu0 %277
        %vm279 = vcmp.ge.f32.partialorder %v276, %v278
        %v280 = vsel %vm279, %v180, 128
        %v281 = vand.u32 %v280, 65535
        %v282 = vshra.s32 %v280, 16
        %v283 = vcvt.s32.f32 %v281
        %v284 = vcvt.s32.f32 %v282
        %285 = vmin.xlane.f32.xlu0 %v284
        %v286 = vpop.xlane.xlu0 %285
        %vm287 = vcmp.eq.f32.partialorder %v284, %v286
        %v288 = vsel %vm287, %v283, inf
        %289 = vmin.xlane.f32.xlu0 %v288
        %v290 = vpop.xlane.xlu0 %289
        %v291 = vcvt.f32.s32 %v290
        %v292 = vcvt.f32.s32 %v286
        %v293 = vshll.u32 %v292, 16
        %v294 = vadd.s32 %v293, %v291
        %vm295 = vcmp.eq.s32.totalorder %v180, 4
        %v296 = vmul.f32 %v278, %v178
        %v297 = vsel %vm295, %v296, %v273
        %v298 = vsel %vm295, %v294, %v274
        %299 = vst [vmem:[%s162] sm:$0xff] %v297
        %300 = vst [vmem:[%s169] sm:$0xff] %v298
        %s301 = sand.u32 %s57, 1
        %s302 = scalar_lea.sflag [#allocation4], %s301
        %s303 = sand.u32 %s57, 1
        %s304 = smul.addr %s303, 8
        %s305 = scalar_lea.vmem [#allocation5], %s304
        %s306 = sand.u32 %s83, 1
        %s307 = scalar_lea.sflag [#allocation7], %s306
        %s308 = sand.u32 %s83, 1
        %s309 = smul.addr %s308, 8
        %s310 = scalar_lea.vmem [#allocation6], %s309
        // Predicated region
        $region29: #{tpu_custom_call.1} parent=23 // pred_check
          %p311 = pneg %p67
        $region30: #{tpu_custom_call.1} parent=23 // pred_check_branch
          %313 = sbr.rel (%p311) target = $region32
        $region31: #{tpu_custom_call.1} parent=23 // pred_region
          %s315 = ssub.s32 128, 128
          %316 = vsyncadd %s302, %s315
          %s317 = smul.addr %s23, 128
          %s318 = scalar_lea.hbm %s1, %s317
          %s320 = sshll.u32 %s305, 4
          %s321 = int_to_ptr.vmem [resolvable:$true] %s320
          %323 = dma.vmem_to_hbm [thread:$0]  %s321, 128, %s318, %s302
        $region32: #{tpu_custom_call.1} parent=23 // pred_fallthru
          _
        // Predicated region
        $region33: #{tpu_custom_call.1} parent=23 // pred_check
          %p324 = pneg %p93
        $region34: #{tpu_custom_call.1} parent=23 // pred_check_branch
          %326 = sbr.rel (%p324) target = $region36
        $region35: #{tpu_custom_call.1} parent=23 // pred_region
          %s328 = ssub.s32 128, 128
          %329 = vsyncadd %s307, %s328
          %s330 = smul.addr %s23, 128
          %s331 = scalar_lea.hbm %s2, %s330
          %s333 = sshll.u32 %s310, 4
          %s334 = int_to_ptr.vmem [resolvable:$true] %s333
          %336 = dma.vmem_to_hbm [thread:$0]  %s334, 128, %s331, %s307
        $region36: #{tpu_custom_call.1} parent=23 // pred_fallthru
          _
      $region24: #{tpu_custom_call.1} parent=5 // pred_fallthru
        _
      %p337 = scmp.le.s32.totalorder 2, %s18
      // Predicated region
      $region37: #{tpu_custom_call.1} parent=5 // pred_check
        %p338 = pneg %p337
      $region38: #{tpu_custom_call.1} parent=5 // pred_check_branch
        %340 = sbr.rel (%p338) target = $region40
      $region39: #{tpu_custom_call.1} parent=5 // pred_region
        %s341 = ssub.s32 %s18, 2
        // Predicated region
        $region41: #{tpu_custom_call.1} parent=39 // pred_check
          %p342 = pneg %p73
        $region42: #{tpu_custom_call.1} parent=39 // pred_check_branch
          %344 = sbr.rel (%p342) target = $region44
        $region43: #{tpu_custom_call.1} parent=39 // pred_region
          %s345 = sand.u32 %s58, 1
          %s346 = scalar_lea.sflag [#allocation4], %s345
          %s347 = sand.u32 %s58, 1
          %s348 = smul.addr %s347, 8
          %s349 = scalar_lea.vmem [#allocation5], %s348
          %350 = dma.done %s346, 128
        $region44: #{tpu_custom_call.1} parent=39 // pred_fallthru
          _
        // Predicated region
        $region45: #{tpu_custom_call.1} parent=39 // pred_check
          %p351 = pneg %p99
        $region46: #{tpu_custom_call.1} parent=39 // pred_check_branch
          %353 = sbr.rel (%p351) target = $region48
        $region47: #{tpu_custom_call.1} parent=39 // pred_region
          %s354 = sand.u32 %s84, 1
          %s355 = scalar_lea.sflag [#allocation7], %s354
          %s356 = sand.u32 %s84, 1
          %s357 = smul.addr %s356, 8
          %s358 = scalar_lea.vmem [#allocation6], %s357
          %359 = dma.done %s355, 128
        $region48: #{tpu_custom_call.1} parent=39 // pred_fallthru
          _
      $region40: #{tpu_custom_call.1} parent=5 // pred_fallthru
        _
    $region6: #{tpu_custom_call.1} parent=1 // loop_footer
      %s22 = sadd.s32 1, %s18
    $region7: #{tpu_custom_call.1} parent=1 // loop_footer_branch
      %17 = sbr.rel target = $region3
    $region8: #{tpu_custom_call.1} parent=1 // loop_exit
      _
    %360 = vsyncpa [#allocation3], 1
    %s361 = scalar_lea.sflag [#allocation3], 1
    %362 = vsyncpa %s361, 1
    %363 = vsyncpa [#allocation4], 1
    %s364 = scalar_lea.sflag [#allocation4], 1
    %365 = vsyncpa %s364, 1
    %366 = vsyncpa [#allocation7], 1
    %s367 = scalar_lea.sflag [#allocation7], 1
    %368 = vsyncpa %s367, 1

</llo_original>
